<compile_context>
chip_gen: v7x
topology: tpu7x:2x2x1
jax: 0.10.0
libtpu: 0.0.40
codegen_flags: <defaults>
</compile_context>

<pallas_src>
import numpy as np
import jax
import jax.numpy as jnp
from jax import lax
from jax.experimental import pallas as pl
from jax.experimental.pallas import tpu as pltpu

WEIGHT_REGULARIZER = 1e-6
DROPOUT_REGULARIZER = 1e-5
EPS = 1e-7
TEMP = 0.1

# Default tile caps: ~6 MiB live with double buffering (+ <=8 MiB xd cache)
# -> safe on v7x (64 MiB VMEM); raise on v5e/v6e (128 MiB) for fewer steps.
DEF_TB, DEF_TN, DEF_TK = 256, 512, 512
XD_CACHE_BUDGET_BYTES = 8 * 1024 * 1024


def _gate_and_mask(logit_p, inv_retain, x, u):
    """Concrete-dropout keep-gate applied to one x tile (f32 math)."""
    # keep = (1 - sigmoid(g / T)) / (1 - p) == sigmoid(-g / T) * inv_retain
    gate = logit_p + jnp.log(u + EPS) - jnp.log(1.0 - u + EPS)
    keep = jax.nn.sigmoid(gate * (-1.0 / TEMP)) * inv_retain
    return x * keep


def _make_kernel(use_cache):
    """Fused concrete-dropout + linear kernel.

    Grid: (i over B tiles, j over D_out tiles, k over D_in tiles), k innermost.
    The f32 output block (i, j) stays resident across k and doubles as the
    accumulator (initialised with the bias at k == 0).  When use_cache is True
    the dropout gate runs only at j == 0; later j tiles reuse the cached panel.
    """

    def compute(scal_ref, x_ref, u_ref, w_ref, b_ref, o_ref, xd_ref):
        j = pl.program_id(1)
        k = pl.program_id(2)

        @pl.when(k == 0)
        def _():
            o_ref[...] = jnp.broadcast_to(b_ref[...], o_ref.shape)

        if use_cache:
            @pl.when(j == 0)
            def _():
                xd_ref[k] = _gate_and_mask(scal_ref[0], scal_ref[1],
                                           x_ref[...], u_ref[...])
            xd = xd_ref[k]
        else:
            xd = _gate_and_mask(scal_ref[0], scal_ref[1],
                                x_ref[...], u_ref[...])

        # W arrives pre-transposed (D_in, D_out) and pre-cast to bf16: plain
        # NN contraction, bf16 MXU operands, f32 accumulation into o_ref.
        o_ref[...] += lax.dot_general(
            xd.astype(jnp.bfloat16), w_ref[...],
            dimension_numbers=(((1,), (0,)), ((), ())),
            preferred_element_type=jnp.float32)

    if use_cache:
        def kernel(scal_ref, x_ref, u_ref, w_ref, b_ref, o_ref, xd_ref):
            compute(scal_ref, x_ref, u_ref, w_ref, b_ref, o_ref, xd_ref)
    else:
        def kernel(scal_ref, x_ref, u_ref, w_ref, b_ref, o_ref):
            compute(scal_ref, x_ref, u_ref, w_ref, b_ref, o_ref, None)
    return kernel


def _round_up(x, m):
    return ((x + m - 1) // m) * m


def concrete_dropout_linear(x, p_logit, W, b, noise=None, seed=0,
                            weight_regularizer=WEIGHT_REGULARIZER,
                            dropout_regularizer=DROPOUT_REGULARIZER,
                            tb=DEF_TB, tn=DEF_TN, tk=DEF_TK):
    """Forward of ConcreteDropout()(x, nn.Linear(D_in, D_out)).

    x: (B, D_in); W: (D_out, D_in) torch convention; b: (D_out,); p_logit: (1,)
    noise: optional uniform[0,1) tensor of x's shape (bit-parity testing);
           if None, noise is generated with jax.random using `seed`.
    Returns (out (B, D_out) f32, regularization (1,) f32).
    """
    x = x.astype(jnp.float32)
    W = W.astype(jnp.float32)
    b = b.astype(jnp.float32)
    B, D_in = x.shape
    D_out = W.shape[0]

    if noise is None:
        noise = jax.random.uniform(jax.random.PRNGKey(seed), x.shape,
                                   dtype=jnp.float32)
    noise = noise.astype(jnp.float32)

    # ---- p-only scalar math hoisted out of the kernel ----------------------
    p = jax.nn.sigmoid(p_logit.astype(jnp.float32).reshape(1))            # (1,)
    logit_p = jnp.log(p + EPS) - jnp.log(1.0 - p + EPS)
    inv_retain = 1.0 / (1.0 - p)
    scalars = jnp.concatenate([logit_p, inv_retain]).astype(jnp.float32)  # (2,)

    # ---- regularizer: noise-independent, exact f32, tiny XLA reduce --------
    ssq = jnp.sum(W * W) + jnp.sum(b * b)
    weights_reg = weight_regularizer * ssq / (1.0 - p)
    dropout_reg = p * jnp.log(p) + (1.0 - p) * jnp.log(1.0 - p)
    dropout_reg = dropout_reg * dropout_regularizer * D_in   # x[0].numel()
    regularization = weights_reg + dropout_reg

    # ---- tile sizes / padding to tile multiples -----------------------------
    TB = tb if B > tb else B
    TK = tk if D_in > tk else D_in
    TN = tn if D_out > tn else D_out
    Bp, Kp, Np = _round_up(B, TB), _round_up(D_in, TK), _round_up(D_out, TN)
    if (Bp, Kp) != (B, D_in):
        x = jnp.pad(x, ((0, Bp - B), (0, Kp - D_in)))
        noise = jnp.pad(noise, ((0, Bp - B), (0, Kp - D_in)),
                        constant_values=0.5)
    # One-time wrapper-side transpose + bf16 cast: Wt is (Kp, Np) bf16.
    Wt = jnp.pad(W, ((0, Np - D_out), (0, Kp - D_in))).T.astype(jnp.bfloat16)
    b2 = jnp.pad(b, (0, Np - D_out)).reshape(1, Np)

    ni, nj, nk = Bp // TB, Np // TN, Kp // TK
    grid = (ni, nj, nk)

    # Cache the masked x panel across output-column tiles only when there is
    # reuse (nj > 1) and the panel fits a modest VMEM budget.
    use_cache = (nj > 1) and (TB * Kp * 4 <= XD_CACHE_BUDGET_BYTES)

    smem_spec = pl.BlockSpec(memory_space=pltpu.MemorySpace.SMEM)
    x_spec = pl.BlockSpec((TB, TK), lambda i, j, k: (i, k))
    w_spec = pl.BlockSpec((TK, TN), lambda i, j, k: (k, j))
    b_spec = pl.BlockSpec((1, TN), lambda i, j, k: (0, j))
    o_spec = pl.BlockSpec((TB, TN), lambda i, j, k: (i, j))

    scratch = []
    if use_cache:
        scratch.append(pltpu.VMEM((nk, TB, TK), jnp.float32))

    cost = pl.CostEstimate(
        flops=int(2 * Bp * Kp * Np),
        transcendentals=int(3 * Bp * Kp * (1 if use_cache else nj)),
        bytes_accessed=int(4 * nj * Bp * Kp * 2     # x + noise (f32, nj passes)
                           + 2 * ni * Kp * Np       # Wt (bf16, ni passes)
                           + 4 * Bp * Np))          # out (f32)
    # The xd cache is reused across j, so j must run sequentially on one core.
    dims = (("parallel", "arbitrary", "arbitrary") if use_cache
            else ("parallel", "parallel", "arbitrary"))
    params = pltpu.CompilerParams(
        dimension_semantics=dims,
        vmem_limit_bytes=48 * 1024 * 1024)

    out = pl.pallas_call(
        _make_kernel(use_cache),
        out_shape=jax.ShapeDtypeStruct((Bp, Np), jnp.float32),
        grid=grid,
        in_specs=[smem_spec, x_spec, x_spec, w_spec, b_spec],
        out_specs=o_spec,
        scratch_shapes=scratch,
        compiler_params=params,
        cost_estimate=cost,
    )(scalars, x, noise, Wt, b2)

    return out[:B, :D_out], regularization


def _reference(x, noise, p_logit, W, b,
               weight_regularizer=WEIGHT_REGULARIZER,
               dropout_regularizer=DROPOUT_REGULARIZER):
    """Pure-JAX reference mirroring the PyTorch forward with the same noise."""
    p = jax.nn.sigmoid(p_logit)
    g = (jnp.log(p + EPS) - jnp.log(1.0 - p + EPS)
         + jnp.log(noise + EPS) - jnp.log(1.0 - noise + EPS))
    drop_prob = jax.nn.sigmoid(g / TEMP)
    xd = x * (1.0 - drop_prob) / (1.0 - p)
    out = xd @ W.T + b
    ssq = jnp.sum(W ** 2) + jnp.sum(b ** 2)
    weights_reg = weight_regularizer * ssq / (1.0 - p)
    dropout_reg = p * jnp.log(p) + (1.0 - p) * jnp.log(1.0 - p)
    dropout_reg = dropout_reg * dropout_regularizer * x.shape[1]
    return out, weights_reg + dropout_reg


def _make_case(key, B, D_in, D_out):
    kx, kn, kw, kb = jax.random.split(key, 4)
    x = jax.random.normal(kx, (B, D_in), dtype=jnp.float32)
    noise = jax.random.uniform(kn, (B, D_in), dtype=jnp.float32)
    # torch init: uniform(logit(0.1), logit(0.1)) -> deterministic.
    p_logit = jnp.full((1,), float(np.log(0.1) - np.log(0.9)), dtype=jnp.float32)
    bound = 1.0 / np.sqrt(D_in)
    W = jax.random.uniform(kw, (D_out, D_in), minval=-bound, maxval=bound,
                           dtype=jnp.float32)
    b = jax.random.uniform(kb, (D_out,), minval=-bound, maxval=bound,
                           dtype=jnp.float32)
    return x, noise, p_logit, W, b


if __name__ == "__main__":
    key = jax.random.PRNGKey(0)
    k1, k2 = jax.random.split(key)

    # Case 1: real (2, 2, 3) grid with small tiles -> xd-cache path exercised.
    x, noise, p_logit, W, b = _make_case(k1, 16, 384, 256)
    out, reg = concrete_dropout_linear(x, p_logit, W, b, noise=noise,
                                       tb=8, tn=128, tk=128)
    out, reg = jax.block_until_ready((out, reg))
    out_ref, reg_ref = _reference(x, noise, p_logit, W, b)
    np.testing.assert_allclose(np.asarray(out), np.asarray(out_ref),
                               rtol=1e-2, atol=1e-2)
    np.testing.assert_allclose(np.asarray(reg), np.asarray(reg_ref),
                               rtol=1e-4, atol=1e-6)

    # Case 1b: same inputs through default (capped) tiling -> single block.
    out2, reg2 = concrete_dropout_linear(x, p_logit, W, b, noise=noise)
    out2 = jax.block_until_ready(out2)
    np.testing.assert_allclose(np.asarray(out2), np.asarray(out_ref),
                               rtol=1e-2, atol=1e-2)
    np.testing.assert_allclose(np.asarray(reg2), np.asarray(reg_ref),
                               rtol=1e-4, atol=1e-6)

    # Case 2: non-multiple shapes -> exercised via wrapper padding (+ cache).
    x3, noise3, p_logit3, W3, b3 = _make_case(k2, 10, 200, 130)
    out3, reg3 = concrete_dropout_linear(x3, p_logit3, W3, b3, noise=noise3,
                                         tb=8, tn=128, tk=128)
    out3 = jax.block_until_ready(out3)
    out3_ref, reg3_ref = _reference(x3, noise3, p_logit3, W3, b3)
    np.testing.assert_allclose(np.asarray(out3), np.asarray(out3_ref),
                               rtol=1e-2, atol=1e-2)
    np.testing.assert_allclose(np.asarray(reg3), np.asarray(reg3_ref),
                               rtol=1e-4, atol=1e-6)

    # Case 3: wrapper-generated noise (different random stream than reference);
    # the regularizer is noise-independent and must still match exactly.
    out4, reg4 = concrete_dropout_linear(x, p_logit, W, b, noise=None,
                                         seed=1234, tb=8, tn=128, tk=128)
    out4 = jax.block_until_ready(out4)
    assert out4.shape == (16, 256)
    assert bool(jnp.all(jnp.isfinite(out4)))
    np.testing.assert_allclose(np.asarray(reg4), np.asarray(reg_ref),
                               rtol=1e-4, atol=1e-6)

    print("KERNEL_OK")
</pallas_src>

<mosaic_0001>
module attributes {stable_mosaic.version = 11 : i64} {
  func.func @kernel(%arg0: i32, %arg1: i32, %arg2: i32, %arg3: memref<2xf32, #tpu.memory_space<smem>>, %arg4: memref<8x128xf32, #tpu.memory_space<vmem>>, %arg5: memref<8x128xf32, #tpu.memory_space<vmem>>, %arg6: memref<128x128xbf16, #tpu.memory_space<vmem>>, %arg7: memref<1x128xf32, #tpu.memory_space<vmem>>, %arg8: memref<8x128xf32, #tpu.memory_space<vmem>>, %arg9: memref<3x8x128xf32, #tpu.memory_space<vmem>>) attributes {dimension_semantics = [#tpu.dimension_semantics<parallel>, #tpu.dimension_semantics<arbitrary>, #tpu.dimension_semantics<arbitrary>], iteration_bounds = array<i64: 2, 2, 3>, scalar_prefetch = 0 : i64, scratch_operands = 1 : i64, tpu.core_type = #tpu.core_type<tc>, window_params = [{transform_indices = @transform_0, window_bounds = array<i64: 2>}, {transform_indices = @transform_1, window_bounds = array<i64: 8, 128>}, {transform_indices = @transform_2, window_bounds = array<i64: 8, 128>}, {transform_indices = @transform_3, window_bounds = array<i64: 128, 128>}, {transform_indices = @transform_4, window_bounds = array<i64: 1, 128>}, {transform_indices = @transform_5, window_bounds = array<i64: 8, 128>}]} {
    %c0_i32 = arith.constant 0 : i32
    %0 = arith.cmpi eq, %arg2, %c0_i32 : i32
    %1 = arith.extui %0 : i1 to i32
    %c0_i32_0 = arith.constant 0 : i32
    %2 = arith.cmpi ne, %1, %c0_i32_0 : i32
    scf.if %2 {
      %c0_10 = arith.constant 0 : index
      %c0_11 = arith.constant 0 : index
      %15 = vector.load %arg7[%c0_10, %c0_11] : memref<1x128xf32, #tpu.memory_space<vmem>>, vector<1x128xf32>
      %16 = vector.shape_cast %15 : vector<1x128xf32> to vector<1x128xf32>
      %17 = vector.broadcast %16 : vector<1x128xf32> to vector<8x128xf32>
      %c0_12 = arith.constant 0 : index
      %c0_13 = arith.constant 0 : index
      %18 = vector.load %arg8[%c0_12, %c0_13] : memref<8x128xf32, #tpu.memory_space<vmem>>, vector<8x128xf32>
      tpu.vector_store %arg8[%c0_12, %c0_13], %17 {strides = array<i32>} : memref<8x128xf32, #tpu.memory_space<vmem>>, vector<8x128xf32>,
    } else {
    }
    %c0_i32_1 = arith.constant 0 : i32
    %3 = arith.cmpi eq, %arg1, %c0_i32_1 : i32
    %4 = arith.extui %3 : i1 to i32
    %c0_i32_2 = arith.constant 0 : i32
    %5 = arith.cmpi ne, %4, %c0_i32_2 : i32
    scf.if %5 {
      %c0_10 = arith.constant 0 : index
      %15 = memref.load %arg3[%c0_10] : memref<2xf32, #tpu.memory_space<smem>>
      %c1 = arith.constant 1 : index
      %16 = memref.load %arg3[%c1] : memref<2xf32, #tpu.memory_space<smem>>
      %c0_11 = arith.constant 0 : index
      %c0_12 = arith.constant 0 : index
      %17 = vector.load %arg4[%c0_11, %c0_12] : memref<8x128xf32, #tpu.memory_space<vmem>>, vector<8x128xf32>
      %c0_13 = arith.constant 0 : index
      %c0_14 = arith.constant 0 : index
      %18 = vector.load %arg5[%c0_13, %c0_14] : memref<8x128xf32, #tpu.memory_space<vmem>>, vector<8x128xf32>
      %cst_15 = arith.constant 1.000000e-07 : f32
      %19 = vector.broadcast %cst_15 : f32 to vector<8x128xf32>
      %20 = arith.addf %18, %19 : vector<8x128xf32>
      %21 = math.log %20 : vector<8x128xf32>
      %22 = vector.broadcast %15 : f32 to vector<8x128xf32>
      %23 = arith.addf %22, %21 : vector<8x128xf32>
      %cst_16 = arith.constant 1.000000e+00 : f32
      %24 = vector.broadcast %cst_16 : f32 to vector<8x128xf32>
      %25 = arith.subf %24, %18 : vector<8x128xf32>
      %cst_17 = arith.constant 1.000000e-07 : f32
      %26 = vector.broadcast %cst_17 : f32 to vector<8x128xf32>
      %27 = arith.addf %25, %26 : vector<8x128xf32>
      %28 = math.log %27 : vector<8x128xf32>
      %29 = arith.subf %23, %28 : vector<8x128xf32>
      %cst_18 = arith.constant -1.000000e+01 : f32
      %30 = vector.broadcast %cst_18 : f32 to vector<8x128xf32>
      %31 = arith.mulf %29, %30 : vector<8x128xf32>
      %32 = arith.negf %31 : vector<8x128xf32>
      %33 = math.exp %32 : vector<8x128xf32>
      %cst_19 = arith.constant 1.000000e+00 : f32
      %34 = vector.broadcast %cst_19 : f32 to vector<8x128xf32>
      %35 = arith.addf %34, %33 : vector<8x128xf32>
      %36 = arith.divf %34, %35 : vector<8x128xf32>
      %37 = vector.broadcast %16 : f32 to vector<8x128xf32>
      %38 = arith.mulf %36, %37 : vector<8x128xf32>
      %39 = arith.mulf %17, %38 : vector<8x128xf32>
      %40 = arith.index_cast %arg2 : i32 to index
      %c0_20 = arith.constant 0 : index
      %c0_21 = arith.constant 0 : index
      %41 = vector.load %arg9[%40, %c0_20, %c0_21] : memref<3x8x128xf32, #tpu.memory_space<vmem>>, vector<1x8x128xf32>
      %42 = vector.shape_cast %41 : vector<1x8x128xf32> to vector<8x128xf32>
      %43 = vector.shape_cast %39 : vector<8x128xf32> to vector<1x8x128xf32>
      tpu.vector_store %arg9[%40, %c0_20, %c0_21], %43 {strides = array<i32>} : memref<3x8x128xf32, #tpu.memory_space<vmem>>, vector<1x8x128xf32>,
    } else {
    }
    %6 = arith.index_cast %arg2 : i32 to index
    %c0 = arith.constant 0 : index
    %c0_3 = arith.constant 0 : index
    %7 = vector.load %arg9[%6, %c0, %c0_3] : memref<3x8x128xf32, #tpu.memory_space<vmem>>, vector<1x8x128xf32>
    %8 = vector.shape_cast %7 : vector<1x8x128xf32> to vector<8x128xf32>
    %c0_4 = arith.constant 0 : index
    %c0_5 = arith.constant 0 : index
    %9 = vector.load %arg8[%c0_4, %c0_5] : memref<8x128xf32, #tpu.memory_space<vmem>>, vector<8x128xf32>
    %10 = arith.truncf %8 : vector<8x128xf32> to vector<8x128xbf16>
    %c0_6 = arith.constant 0 : index
    %c0_7 = arith.constant 0 : index
    %11 = vector.load %arg6[%c0_6, %c0_7] : memref<128x128xbf16, #tpu.memory_space<vmem>>, vector<128x128xbf16>
    %cst = arith.constant dense<0.000000e+00> : vector<8x128xf32>
    %12 = tpu.matmul %10, %11, %cst {dimension_numbers = #tpu.dot_dimension_numbers<[1], [0], [0], [1], [0, 0, 1, 1], [], []>} : vector<8x128xbf16>, vector<128x128xbf16>, vector<8x128xf32> -> vector<8x128xf32>
    %13 = arith.addf %9, %12 : vector<8x128xf32>
    %c0_8 = arith.constant 0 : index
    %c0_9 = arith.constant 0 : index
    %14 = vector.load %arg8[%c0_8, %c0_9] : memref<8x128xf32, #tpu.memory_space<vmem>>, vector<8x128xf32>
    tpu.vector_store %arg8[%c0_8, %c0_9], %13 {strides = array<i32>} : memref<8x128xf32, #tpu.memory_space<vmem>>, vector<8x128xf32>,
    return
  }
  func.func @transform_0(%arg0: i32, %arg1: i32, %arg2: i32) -> i32 {
    %c0_i32 = arith.constant 0 : i32
    %c0_i32_0 = arith.constant 0 : i32
    return %c0_i32 : i32
  }
  func.func @transform_1(%arg0: i32, %arg1: i32, %arg2: i32) -> (i32, i32) {
    %c0_i32 = arith.constant 0 : i32
    return %arg0, %arg2 : i32, i32
  }
  func.func @transform_2(%arg0: i32, %arg1: i32, %arg2: i32) -> (i32, i32) {
    %c0_i32 = arith.constant 0 : i32
    return %arg0, %arg2 : i32, i32
  }
  func.func @transform_3(%arg0: i32, %arg1: i32, %arg2: i32) -> (i32, i32) {
    %c0_i32 = arith.constant 0 : i32
    return %arg2, %arg1 : i32, i32
  }
  func.func @transform_4(%arg0: i32, %arg1: i32, %arg2: i32) -> (i32, i32) {
    %c0_i32 = arith.constant 0 : i32
    %c0_i32_0 = arith.constant 0 : i32
    return %c0_i32, %arg1 : i32, i32
  }
  func.func @transform_5(%arg0: i32, %arg1: i32, %arg2: i32) -> (i32, i32) {
    %c0_i32 = arith.constant 0 : i32
    return %arg0, %arg1 : i32, i32
  }
}

</mosaic_0001>

<llo_original>
// kernel: tpu_custom_call.1
$region0: #{tpu_custom_call.1}
  #allocation0 [shape = 'u32[]', space=smem, size = 0x4, offset = 0x4, fixed_abs, tag = 'smem constant byte address 0x4 - core index']
  #allocation1 [shape = 'u32[144,128]{1,0:T(1,128)}', space=vmem, size = 0x12000, scoped, tag = 'internal scratch']
  #allocation2 [shape = 'f32[3,8,128]{2,1,0:T(8,128)}', space=vmem, size = 0x3000, scoped, tag = 'scratch operand']
  %s0 = inlined_call_operand.hbm [shape: f32[2], index: 0, kind: input, shape index: {}]
  %s1 = inlined_call_operand.hbm [shape: f32[16,384], index: 1, kind: input, shape index: {}]
  %s2 = inlined_call_operand.hbm [shape: f32[16,384], index: 2, kind: input, shape index: {}]
  %s3 = inlined_call_operand.hbm [shape: bf16[384,256], index: 3, kind: input, shape index: {}]
  %s4 = inlined_call_operand.vmem [shape: f32[1,256], index: 4, kind: input, shape index: {}]
  %s5 = inlined_call_operand.hbm [shape: f32[16,256], index: 5, kind: output, shape index: {}]
  %s6 = sld [smem:[#allocation0]]
  $region77: #{tpu_custom_call.1} parent=0
    _
  %s8 = ssub.s32 1, %s6
  %s9 = scalar_select 0, %s8, %s6
  $region1: #{tpu_custom_call.1} parent=0
    #allocation3 [shape = 'u8[512]{0}', space=smem, size = 0x200, scoped, tag = 'input window, operand 0, single buffered']
    #allocation4 [shape = 's32[2]{0}', space=sflag, size = 0x8, scoped, tag = 'scoped memory for tpu_custom_call.1']
    #allocation5 [shape = 's32[2]{0}', space=sflag, size = 0x8, scoped, tag = 'scoped memory for tpu_custom_call.1']
    #allocation6 [shape = 's32[2]{0}', space=sflag, size = 0x8, scoped, tag = 'scoped memory for tpu_custom_call.1']
    #allocation7 [shape = 'u8[8192]{0}', space=vmem, size = 0x2000, scoped, tag = 'input window, operand 1']
    #allocation8 [shape = 'u8[8192]{0}', space=vmem, size = 0x2000, scoped, tag = 'input window, operand 2']
    #allocation9 [shape = 's32[2]{0}', space=sflag, size = 0x8, scoped, tag = 'scoped memory for tpu_custom_call.1']
    #allocation10 [shape = 'u8[65536]{0}', space=vmem, size = 0x10000, scoped, tag = 'input window, operand 3']
    #allocation11 [shape = 'u8[8192]{0}', space=vmem, size = 0x2000, scoped, tag = 'output window, operand 0']
    %10 = vsyncpa [#allocation6], 0
    %11 = vsyncpa [#allocation4], 0
    %s12 = scalar_lea.sflag [#allocation4], 1
    %13 = vsyncpa %s12, 0
    %14 = vsyncpa [#allocation9], 0
    %s15 = scalar_lea.sflag [#allocation9], 1
    %16 = vsyncpa %s15, 0
    %17 = vsyncpa [#allocation5], 0
    %s18 = scalar_lea.sflag [#allocation5], 1
    %19 = vsyncpa %s18, 0
    loop: start=0, step=1, limit=14
    $region2: #{tpu_custom_call.1} parent=1 // loop_pre_header
      _
    $region3: #{tpu_custom_call.1} parent=1 // loop_header
      %s21 = sphi 0, %s25
      %p22 = scmp.ge.s32.totalorder %s21, 14
      %s28 = sphi 0, %s47
      %s29 = sphi 0, %s43
      %s30 = sphi 0, %s39
      %s31 = sphi 0, %s28
      %s32 = sphi 0, %s29
      %s33 = sphi 0, %s30
      %s34 = sphi 0, %s31
      %s35 = sphi 0, %s32
      %s36 = sphi 0, %s33
      %s48 = sphi 0, %s48
      %s50 = sphi 0, %s48
      %s51 = sphi 0, %s50
      %s65 = sphi 0, %s51
      %s73 = sphi 0, %s75
      %s76 = sphi 0, %s73
      %s77 = sphi 0, %s76
      %s93 = sphi 0, %s77
      %s101 = sphi 0, %s103
      %s104 = sphi 0, %s101
      %s105 = sphi 0, %s104
      %s121 = sphi 0, %s105
      %s129 = sphi 0, %s131
      %s132 = sphi 0, %s129
      %s133 = sphi 0, %s132
      %s149 = sphi 0, %s133
      %s155 = sphi 0, %s157
      %s158 = sphi 0, %s155
      %s159 = sphi 0, %s158
      %s175 = sphi 0, %s159
      %s183 = sphi 0, %s185
      %s186 = sphi 0, %s183
      %s187 = sphi 0, %s186
      %s203 = sphi 0, %s187
    $region4: #{tpu_custom_call.1} parent=1 // loop_header_branch
      %24 = sbr.rel (%p22) target = $region8
    $region5: #{tpu_custom_call.1} parent=1 // loop_body
      %s26 = ssub.s32 %s21, 1
      %s27 = ssub.s32 %s21, 2
      %s37 = sadd.s32 1, %s30
      %p38 = scmp.ge.s32.totalorder %s37, 3
      %s39 = scalar_select %p38, 0, %s37
      %s40 = sadd.s32 1, %s29
      %s41 = scalar_select %p38, %s40, %s29
      %p42 = scmp.ge.s32.totalorder %s41, 2
      %s43 = scalar_select %p42, 0, %s41
      %s44 = sadd.s32 1, %s28
      %s45 = scalar_select %p42, %s44, %s28
      %p46 = scmp.ge.s32.totalorder %s45, 2
      %s47 = scalar_select %p46, 0, %s45
      %s49 = sadd.s32 %s48, 1
      %p52 = scmp.eq.s32.totalorder %s21, 11
      %p53 = scmp.ne.s32.totalorder %s48, %s50
      %p54 = scmp.eq.s32.totalorder %s21, 0
      %p55 = por %p53, %p54
      %p56 = scmp.ne.s32.totalorder %s48, %s50
      %p57 = scmp.eq.s32.totalorder %s26, 11
      %p58 = por %p56, %p57
      %p59 = scmp.ne.s32.totalorder %s50, %s51
      %p60 = scmp.eq.s32.totalorder %s26, 0
      %p61 = por %p59, %p60
      %p62 = scmp.ne.s32.totalorder %s50, %s51
      %p63 = scmp.eq.s32.totalorder %s27, 11
      %p64 = por %p62, %p63
      %p66 = scmp.ne.s32.totalorder %s51, %s65
      %p67 = scmp.eq.s32.totalorder %s27, 0
      %p68 = por %p66, %p67
      %s69 = ssub.s32 %s28, %s47
      %s70 = ssub.s32 %s30, %s39
      %s71 = sor.u32 %s69, %s70
      %p72 = scmp.eq.s32.totalorder %s71, 0
      %s74 = sadd.s32 %s73, 1
      %s75 = scalar_select %p72, %s73, %s74
      %p78 = pneg %p72
      %p79 = scmp.eq.s32.totalorder %s21, 11
      %p80 = por %p78, %p79
      %p81 = scmp.ne.s32.totalorder %s73, %s76
      %p82 = scmp.eq.s32.totalorder %s21, 0
      %p83 = por %p81, %p82
      %p84 = scmp.ne.s32.totalorder %s73, %s76
      %p85 = scmp.eq.s32.totalorder %s26, 11
      %p86 = por %p84, %p85
      %p87 = scmp.ne.s32.totalorder %s76, %s77
      %p88 = scmp.eq.s32.totalorder %s26, 0
      %p89 = por %p87, %p88
      %p90 = scmp.ne.s32.totalorder %s76, %s77
      %p91 = scmp.eq.s32.totalorder %s27, 11
      %p92 = por %p90, %p91
      %p94 = scmp.ne.s32.totalorder %s77, %s93
      %p95 = scmp.eq.s32.totalorder %s27, 0
      %p96 = por %p94, %p95
      %s97 = ssub.s32 %s28, %s47
      %s98 = ssub.s32 %s30, %s39
      %s99 = sor.u32 %s97, %s98
      %p100 = scmp.eq.s32.totalorder %s99, 0
      %s102 = sadd.s32 %s101, 1
      %s103 = scalar_select %p100, %s101, %s102
      %p106 = pneg %p100
      %p107 = scmp.eq.s32.totalorder %s21, 11
      %p108 = por %p106, %p107
      %p109 = scmp.ne.s32.totalorder %s101, %s104
      %p110 = scmp.eq.s32.totalorder %s21, 0
      %p111 = por %p109, %p110
      %p112 = scmp.ne.s32.totalorder %s101, %s104
      %p113 = scmp.eq.s32.totalorder %s26, 11
      %p114 = por %p112, %p113
      %p115 = scmp.ne.s32.totalorder %s104, %s105
      %p116 = scmp.eq.s32.totalorder %s26, 0
      %p117 = por %p115, %p116
      %p118 = scmp.ne.s32.totalorder %s104, %s105
      %p119 = scmp.eq.s32.totalorder %s27, 11
      %p120 = por %p118, %p119
      %p122 = scmp.ne.s32.totalorder %s105, %s121
      %p123 = scmp.eq.s32.totalorder %s27, 0
      %p124 = por %p122, %p123
      %s125 = ssub.s32 %s30, %s39
      %s126 = ssub.s32 %s29, %s43
      %s127 = sor.u32 %s125, %s126
      %p128 = scmp.eq.s32.totalorder %s127, 0
      %s130 = sadd.s32 %s129, 1
      %s131 = scalar_select %p128, %s129, %s130
      %p134 = pneg %p128
      %p135 = scmp.eq.s32.totalorder %s21, 11
      %p136 = por %p134, %p135
      %p137 = scmp.ne.s32.totalorder %s129, %s132
      %p138 = scmp.eq.s32.totalorder %s21, 0
      %p139 = por %p137, %p138
      %p140 = scmp.ne.s32.totalorder %s129, %s132
      %p141 = scmp.eq.s32.totalorder %s26, 11
      %p142 = por %p140, %p141
      %p143 = scmp.ne.s32.totalorder %s132, %s133
      %p144 = scmp.eq.s32.totalorder %s26, 0
      %p145 = por %p143, %p144
      %p146 = scmp.ne.s32.totalorder %s132, %s133
      %p147 = scmp.eq.s32.totalorder %s27, 11
      %p148 = por %p146, %p147
      %p150 = scmp.ne.s32.totalorder %s133, %s149
      %p151 = scmp.eq.s32.totalorder %s27, 0
      %p152 = por %p150, %p151
      %s153 = ssub.s32 %s29, %s43
      %p154 = scmp.eq.s32.totalorder %s153, 0
      %s156 = sadd.s32 %s155, 1
      %s157 = scalar_select %p154, %s155, %s156
      %p160 = pneg %p154
      %p161 = scmp.eq.s32.totalorder %s21, 11
      %p162 = por %p160, %p161
      %p163 = scmp.ne.s32.totalorder %s155, %s158
      %p164 = scmp.eq.s32.totalorder %s21, 0
      %p165 = por %p163, %p164
      %p166 = scmp.ne.s32.totalorder %s155, %s158
      %p167 = scmp.eq.s32.totalorder %s26, 11
      %p168 = por %p166, %p167
      %p169 = scmp.ne.s32.totalorder %s158, %s159
      %p170 = scmp.eq.s32.totalorder %s26, 0
      %p171 = por %p169, %p170
      %p172 = scmp.ne.s32.totalorder %s158, %s159
      %p173 = scmp.eq.s32.totalorder %s27, 11
      %p174 = por %p172, %p173
      %p176 = scmp.ne.s32.totalorder %s159, %s175
      %p177 = scmp.eq.s32.totalorder %s27, 0
      %p178 = por %p176, %p177
      %s179 = ssub.s32 %s28, %s47
      %s180 = ssub.s32 %s29, %s43
      %s181 = sor.u32 %s179, %s180
      %p182 = scmp.eq.s32.totalorder %s181, 0
      %s184 = sadd.s32 %s183, 1
      %s185 = scalar_select %p182, %s183, %s184
      %p188 = pneg %p182
      %p189 = scmp.eq.s32.totalorder %s21, 11
      %p190 = por %p188, %p189
      %p191 = scmp.ne.s32.totalorder %s183, %s186
      %p192 = scmp.eq.s32.totalorder %s21, 0
      %p193 = por %p191, %p192
      %p194 = scmp.ne.s32.totalorder %s183, %s186
      %p195 = scmp.eq.s32.totalorder %s26, 11
      %p196 = por %p194, %p195
      %p197 = scmp.ne.s32.totalorder %s186, %s187
      %p198 = scmp.eq.s32.totalorder %s26, 0
      %p199 = por %p197, %p198
      %p200 = scmp.ne.s32.totalorder %s186, %s187
      %p201 = scmp.eq.s32.totalorder %s27, 11
      %p202 = por %p200, %p201
      %p204 = scmp.ne.s32.totalorder %s187, %s203
      %p205 = scmp.eq.s32.totalorder %s27, 0
      %p206 = por %p204, %p205
      %p207 = scmp.le.s32.totalorder 1, %s21
      %p208 = scmp.lt.s32.totalorder %s21, 13
      %p209 = pnand %p207, %p208
      %p210 = pneg %p209
      // Predicated region
      $region9: #{tpu_custom_call.1} parent=5 // pred_check
        _
      $region10: #{tpu_custom_call.1} parent=5 // pred_check_branch
        %212 = sbr.rel (%p209) target = $region12
      $region11: #{tpu_custom_call.1} parent=5 // pred_region
        %s213 = ssub.s32 %s21, 1
        // Predicated region
        $region13: #{tpu_custom_call.1} parent=11 // pred_check
          %p214 = pneg %p61
        $region14: #{tpu_custom_call.1} parent=11 // pred_check_branch
          %216 = sbr.rel (%p214) target = $region16
        $region15: #{tpu_custom_call.1} parent=11 // pred_region
          %s218 = ssub.s32 16, 16
          %219 = vsyncadd [#allocation6], %s218
          %222 = dma.hbm_to_smem %s0, 16, [#allocation3], [#allocation6]
        $region16: #{tpu_custom_call.1} parent=11 // pred_fallthru
          _
      $region12: #{tpu_custom_call.1} parent=5 // pred_fallthru
        _
      %p223 = scmp.lt.s32.totalorder %s21, 12
      // Predicated region
      $region17: #{tpu_custom_call.1} parent=5 // pred_check
        %p224 = pneg %p223
      $region18: #{tpu_custom_call.1} parent=5 // pred_check_branch
        %226 = sbr.rel (%p224) target = $region20
      $region19: #{tpu_custom_call.1} parent=5 // pred_region
        // Predicated region
        $region21: #{tpu_custom_call.1} parent=19 // pred_check
          %p227 = pneg %p83
        $region22: #{tpu_custom_call.1} parent=19 // pred_check_branch
          %229 = sbr.rel (%p227) target = $region24
        $region23: #{tpu_custom_call.1} parent=19 // pred_region
          %s230 = sand.u32 %s73, 1
          %s231 = scalar_lea.sflag [#allocation4], %s230
          %s232 = sand.u32 %s73, 1
          %s233 = smul.addr %s232, 8
          %s234 = scalar_lea.vmem [#allocation7], %s233
          %s236 = ssub.s32 128, 128
          %237 = vsyncadd %s231, %s236
          %s238 = smul.addr %s28, 3
          %s239 = sadd.s32 %s30, %s238
          %s240 = smul.addr %s239, 128
          %s241 = scalar_lea.hbm %s1, %s240
          %s243 = sshll.u32 %s234, 4
          %s244 = int_to_ptr.vmem [resolvable:$true] %s243
          %246 = dma.hbm_to_vmem [thread:$0]  %s241, 128, %s244, %s231
        $region24: #{tpu_custom_call.1} parent=19 // pred_fallthru
          _
        // Predicated region
        $region25: #{tpu_custom_call.1} parent=19 // pred_check
          %p247 = pneg %p111
        $region26: #{tpu_custom_call.1} parent=19 // pred_check_branch
          %249 = sbr.rel (%p247) target = $region28
        $region27: #{tpu_custom_call.1} parent=19 // pred_region
          %s250 = sand.u32 %s21, 1
          %s251 = scalar_lea.sflag [#allocation9], %s250
          %s252 = sand.u32 %s101, 1
          %s253 = smul.addr %s252, 8
          %s254 = scalar_lea.vmem [#allocation8], %s253
          %s256 = ssub.s32 128, 128
          %257 = vsyncadd %s251, %s256
          %s258 = smul.addr %s28, 3
          %s259 = sadd.s32 %s30, %s258
          %s260 = smul.addr %s259, 128
          %s261 = scalar_lea.hbm %s2, %s260
          %s263 = sshll.u32 %s254, 4
          %s264 = int_to_ptr.vmem [resolvable:$true] %s263
          %266 = dma.hbm_to_vmem [thread:$0]  %s261, 128, %s264, %s251
        $region28: #{tpu_custom_call.1} parent=19 // pred_fallthru
          _
        // Predicated region
        $region29: #{tpu_custom_call.1} parent=19 // pred_check
          %p267 = pneg %p139
        $region30: #{tpu_custom_call.1} parent=19 // pred_check_branch
          %269 = sbr.rel (%p267) target = $region32
        $region31: #{tpu_custom_call.1} parent=19 // pred_region
          %s270 = sand.u32 %s21, 1
          %s271 = scalar_lea.sflag [#allocation9], %s270
          %s272 = sand.u32 %s129, 1
          %s273 = smul.addr %s272, 64
          %s274 = scalar_lea.vmem [#allocation10], %s273
          %s275 = smul.u32 16, %s30
          %s277 = ssub.s32 1024, 1024
          %278 = vsyncadd %s271, %s277
          %s279 = smul.addr %s275, 2
          %s280 = sadd.s32 %s29, %s279
          %s281 = smul.addr %s280, 64
          %s282 = scalar_lea.hbm %s3, %s281
          %s283 = sshll.u32 %s274, 4
          %s284 = int_to_ptr.vmem [resolvable:$true] %s283
          %289 = dma.hbm_to_vmem [thread:$0]  %s282, 1024, %s284, %s271, 128, 64, 4
        $region32: #{tpu_custom_call.1} parent=19 // pred_fallthru
          _
        // Predicated region
        $region33: #{tpu_custom_call.1} parent=19 // pred_check
          %p290 = pneg %p165
        $region34: #{tpu_custom_call.1} parent=19 // pred_check_branch
          %292 = sbr.rel (%p290) target = $region36
        $region35: #{tpu_custom_call.1} parent=19 // pred_region
          %p293 = scmp.lt.s32.totalorder %s29, 1
          %s294 = scalar_select %p293, %s29, 1
          %s295 = scalar_lea.vmem %s4, %s294
        $region36: #{tpu_custom_call.1} parent=19 // pred_fallthru
          _
      $region20: #{tpu_custom_call.1} parent=5 // pred_fallthru
        _
      %p296 = scmp.le.s32.totalorder 1, %s21
      %p297 = scmp.lt.s32.totalorder %s21, 13
      %p298 = pnand %p296, %p297
      %p299 = pneg %p298
      // Predicated region
      $region37: #{tpu_custom_call.1} parent=5 // pred_check
        _
      $region38: #{tpu_custom_call.1} parent=5 // pred_check_branch
        %301 = sbr.rel (%p298) target = $region40
      $region39: #{tpu_custom_call.1} parent=5 // pred_region
        %s302 = ssub.s32 %s21, 1
        // Predicated region
        $region41: #{tpu_custom_call.1} parent=39 // pred_check
          %p303 = pneg %p61
        $region42: #{tpu_custom_call.1} parent=39 // pred_check_branch
          %305 = sbr.rel (%p303) target = $region44
        $region43: #{tpu_custom_call.1} parent=39 // pred_region
          %306 = dma.done [#allocation6], 16
        $region44: #{tpu_custom_call.1} parent=39 // pred_fallthru
          _
        %s307 = sand.u32 %s76, 1
        %s308 = scalar_lea.sflag [#allocation4], %s307
        %s309 = sand.u32 %s76, 1
        %s310 = smul.addr %s309, 8
        %s311 = scalar_lea.vmem [#allocation7], %s310
        // Predicated region
        $region45: #{tpu_custom_call.1} parent=39 // pred_check
          %p312 = pneg %p89
        $region46: #{tpu_custom_call.1} parent=39 // pred_check_branch
          %314 = sbr.rel (%p312) target = $region48
        $region47: #{tpu_custom_call.1} parent=39 // pred_region
          %315 = dma.done %s308, 128
        $region48: #{tpu_custom_call.1} parent=39 // pred_fallthru
          _
        %s316 = sand.u32 %s26, 1
        %s317 = scalar_lea.sflag [#allocation9], %s316
        %s318 = sand.u32 %s104, 1
        %s319 = smul.addr %s318, 8
        %s320 = scalar_lea.vmem [#allocation8], %s319
        // Predicated region
        $region49: #{tpu_custom_call.1} parent=39 // pred_check
          %p321 = pneg %p117
        $region50: #{tpu_custom_call.1} parent=39 // pred_check_branch
          %323 = sbr.rel (%p321) target = $region52
        $region51: #{tpu_custom_call.1} parent=39 // pred_region
          %324 = dma.done %s317, 128
        $region52: #{tpu_custom_call.1} parent=39 // pred_fallthru
          _
        %s325 = sand.u32 %s26, 1
        %s326 = scalar_lea.sflag [#allocation9], %s325
        %s327 = sand.u32 %s132, 1
        %s328 = smul.addr %s327, 64
        %s329 = scalar_lea.vmem [#allocation10], %s328
        // Predicated region
        $region53: #{tpu_custom_call.1} parent=39 // pred_check
          %p330 = pneg %p145
        $region54: #{tpu_custom_call.1} parent=39 // pred_check_branch
          %332 = sbr.rel (%p330) target = $region56
        $region55: #{tpu_custom_call.1} parent=39 // pred_region
          %333 = dma.done %s326, 1024
        $region56: #{tpu_custom_call.1} parent=39 // pred_fallthru
          _
        %334 = sfence
        %p335 = pneg %p61
        %p336 = pneg %p58
        %s337 = sand.u32 %s76, 1
        %s338 = scalar_lea.sflag [#allocation4], %s337
        %s339 = sand.u32 %s76, 1
        %s340 = smul.addr %s339, 8
        %s341 = scalar_lea.vmem [#allocation7], %s340
        %p342 = pneg %p89
        %p343 = pneg %p86
        %s344 = sand.u32 %s26, 1
        %s345 = scalar_lea.sflag [#allocation9], %s344
        %s346 = sand.u32 %s104, 1
        %s347 = smul.addr %s346, 8
        %s348 = scalar_lea.vmem [#allocation8], %s347
        %p349 = pneg %p117
        %p350 = pneg %p114
        %s351 = sand.u32 %s26, 1
        %s352 = scalar_lea.sflag [#allocation9], %s351
        %s353 = sand.u32 %s132, 1
        %s354 = smul.addr %s353, 64
        %s355 = scalar_lea.vmem [#allocation10], %s354
        %p356 = pneg %p145
        %p357 = pneg %p142
        %p358 = scmp.lt.s32.totalorder %s32, 1
        %s359 = scalar_select %p358, %s32, 1
        %s360 = scalar_lea.vmem %s4, %s359
        %p361 = pneg %p171
        %p362 = pneg %p168
        %p363 = pneg %p199
        %p364 = pneg %p196
        %s365 = sand.u32 %s186, 1
        %s366 = scalar_lea.sflag [#allocation5], %s365
        %s367 = sand.u32 %s186, 1
        %s368 = smul.addr %s367, 8
        %s369 = scalar_lea.vmem [#allocation11], %s368
        %s370 = smul.u32 16, %s33
        %p371 = scmp.lt.s32.totalorder %s32, 1
        %s372 = scalar_select %p371, %s32, 1
        %s373 = scalar_lea.vmem %s4, %s372
        %p375 = scmp.eq.s32.totalorder %s33, 0
        // Predicated region
        $region57: #{tpu_custom_call.1} parent=39 // pred_check
          %p376 = pneg %p375
        $region58: #{tpu_custom_call.1} parent=39 // pred_check_branch
          %378 = sbr.rel (%p376) target = $region60
        $region59: #{tpu_custom_call.1} parent=39 // pred_region
          %v379 = vld [vmem:[%s373] sm:$0x1]
          %v381 = vlaneseq
          %v382 = vshrl.u32 %v381, 7
          %v383 = vsub.s32 0, %v382
          %v384 = vrot.slane %v379, %v383
          %386 = vst [vmem:[%s369] sm:$0xff] %v384
        $region60: #{tpu_custom_call.1} parent=39 // pred_fallthru
          _
        %p387 = scmp.eq.s32.totalorder %s32, 0
        // Predicated region
        $region61: #{tpu_custom_call.1} parent=39 // pred_check
          %p388 = pneg %p387
        $region62: #{tpu_custom_call.1} parent=39 // pred_check_branch
          %390 = sbr.rel (%p388) target = $region64
        $region63: #{tpu_custom_call.1} parent=39 // pred_region
          %s391 = sld [smem:[#allocation3]]
          %s392 = sld [smem:[#allocation3 + $0x1]]
          %v393 = vld [vmem:[%s311] sm:$0xff]
          %v394 = vld [vmem:[%s320] sm:$0xff]
          %v395 = vadd.f32 %v394, 1e-07
          %v396 = vlog2.pop %v395
          %v397 = vmul.f32 %v396, 0.6931472
          %v398 = vstv %s391
          %v399 = vadd.f32 %v398, %v397
          %v400 = vsub.f32 1.0, %v394
          %v401 = vadd.f32 %v400, 1e-07
          %v402 = vlog2.pop %v401
          %v403 = vmul.f32 %v402, 0.6931472
          %v404 = vsub.f32 %v399, %v403
          %v405 = vmul.f32 %v404, -10.0
          %v406 = vxor.u32 %v405, 2147483648
          %v407 = vmul.f32 %v406, 1.442695
          %v408 = vpow.pop %v407
          %v409 = vadd.f32 %v408, 1.0
          %v410 = vrcp.pop %v409
          %v411 = vmul.f32 1.0, %v410
          %v412 = vstv %s392
          %v413 = vmul.f32 %v411, %v412
          %v414 = vmul.f32 %v393, %v413
          %s415 = smul.u32 %s33, 8
          %s416 = scalar_lea.vmem [#allocation2], %s415
          %417 = vst [vmem:[%s416] sm:$0xff] %v414
        $region64: #{tpu_custom_call.1} parent=39 // pred_fallthru
          _
        %s418 = smul.u32 %s33, 8
        %s419 = scalar_lea.vmem [#allocation2], %s418
        %v420 = vld [vmem:[%s419] sm:$0xff]
        %v421 = vld [vmem:[%s369] sm:$0xff]
        %v422 = vpack.c.bf16 %v420, %v420
        %v423 = vld [vmem:[%s329] sm:$0xf]
        %v424 = vld [vmem:[%s329 + $0x4] sm:$0xf]
        %v425 = vld [vmem:[%s329 + $0x8] sm:$0xf]
        %v426 = vld [vmem:[%s329 + $0xc] sm:$0xf]
        %v427 = vld [vmem:[%s329 + $0x10] sm:$0xf]
        %v428 = vld [vmem:[%s329 + $0x14] sm:$0xf]
        %v429 = vld [vmem:[%s329 + $0x18] sm:$0xf]
        %v430 = vld [vmem:[%s329 + $0x1c] sm:$0xf]
        %v431 = vld [vmem:[%s329 + $0x20] sm:$0xf]
        %v432 = vld [vmem:[%s329 + $0x24] sm:$0xf]
        %v433 = vld [vmem:[%s329 + $0x28] sm:$0xf]
        %v434 = vld [vmem:[%s329 + $0x2c] sm:$0xf]
        %v435 = vld [vmem:[%s329 + $0x30] sm:$0xf]
        %v436 = vld [vmem:[%s329 + $0x34] sm:$0xf]
        %v437 = vld [vmem:[%s329 + $0x38] sm:$0xf]
        %v438 = vld [vmem:[%s329 + $0x3c] sm:$0xf]
        %v455 = vunpack.c.l.b16 %v423
        %v456 = vunpack.c.l.b16 %v424
        %v457 = vunpack.c.l.b16 %v425
        %v458 = vunpack.c.l.b16 %v426
        %v459 = vunpack.c.l.b16 %v427
        %v460 = vunpack.c.l.b16 %v428
        %v461 = vunpack.c.l.b16 %v429
        %v462 = vunpack.c.l.b16 %v430
        %v463 = vunpack.c.l.b16 %v431
        %v464 = vunpack.c.l.b16 %v432
        %v465 = vunpack.c.l.b16 %v433
        %v466 = vunpack.c.l.b16 %v434
        %v467 = vunpack.c.l.b16 %v435
        %v468 = vunpack.c.l.b16 %v436
        %v469 = vunpack.c.l.b16 %v437
        %v470 = vunpack.c.l.b16 %v438
        %v471 = vpack.c.b16 %v456, %v455
        %v472 = vpack.c.b16 %v458, %v457
        %v473 = vpack.c.b16 %v460, %v459
        %v474 = vpack.c.b16 %v462, %v461
        %v475 = vpack.c.b16 %v464, %v463
        %v476 = vpack.c.b16 %v466, %v465
        %v477 = vpack.c.b16 %v468, %v467
        %v478 = vpack.c.b16 %v470, %v469
        %487 = vmatprep.subr.bf16.mxu0 0
        %488 = vmatpush1.bf16.msra.mxu0 %v471
        %489 = vmatprep.subr.bf16.mxu0 0
        %490 = vmatpush1.bf16.msra.mxu0 %v472
        %491 = vmatprep.subr.bf16.mxu0 0
        %492 = vmatpush1.bf16.msra.mxu0 %v473
        %493 = vmatprep.subr.bf16.mxu0 0
        %494 = vmatpush1.bf16.msra.mxu0 %v474
        %495 = vmatprep.subr.bf16.mxu0 0
        %496 = vmatpush1.bf16.msra.mxu0 %v475
        %497 = vmatprep.subr.bf16.mxu0 0
        %498 = vmatpush1.bf16.msra.mxu0 %v476
        %499 = vmatprep.subr.bf16.mxu0 0
        %500 = vmatpush1.bf16.msra.mxu0 %v477
        %501 = vmatprep.subr.bf16.mxu0 0
        %502 = vmatpush1.bf16.msra.mxu0 %v478
        %503 = vmatprep.subr.bf16.mxu0 0
        %504 = vmatpush1.bf16.msra.mxu0 0
        %505 = vmatprep.subr.bf16.mxu0 0
        %506 = vmatpush1.bf16.msra.mxu0 0
        %507 = vmatprep.subr.bf16.mxu0 0
        %508 = vmatpush1.bf16.msra.mxu0 0
        %509 = vmatprep.subr.bf16.mxu0 0
        %510 = vmatpush1.bf16.msra.mxu0 0
        %511 = vmatprep.subr.bf16.mxu0 0
        %512 = vmatpush1.bf16.msra.mxu0 0
        %513 = vmatprep.subr.bf16.mxu0 0
        %514 = vmatpush1.bf16.msra.mxu0 0
        %515 = vmatprep.subr.bf16.mxu0 0
        %516 = vmatpush1.bf16.msra.mxu0 0
        %517 = vmatprep.subr.bf16.mxu0 0
        %518 = vmatpush1.bf16.msra.mxu0 0
        %519 = vmatprep.mubr.bf16.mxu0 0
        %520 = vmatmul.mubr.bf16.gmra.mrb[0].mxu0 %v422
        %v521 = vpop.f32.mrb[0].mxu0
        %v522 = vadd.f32 0.0, %v521
        %v523 = vpop.f32.mrb[0].mxu0
        %v524 = vpop.f32.mrb[0].mxu0
        %v525 = vpop.f32.mrb[0].mxu0
        %526 = vdwg.mxu0
        %v527 = vadd.f32 %v421, %v522
        %528 = vst [vmem:[%s369] sm:$0xff] %v527
        %s529 = sand.u32 %s186, 1
        %s530 = scalar_lea.sflag [#allocation5], %s529
        %s531 = sand.u32 %s186, 1
        %s532 = smul.addr %s531, 8
        %s533 = scalar_lea.vmem [#allocation11], %s532
        // Predicated region
        $region65: #{tpu_custom_call.1} parent=39 // pred_check
          %p534 = pneg %p196
        $region66: #{tpu_custom_call.1} parent=39 // pred_check_branch
          %536 = sbr.rel (%p534) target = $region68
        $region67: #{tpu_custom_call.1} parent=39 // pred_region
          %s538 = ssub.s32 128, 128
          %539 = vsyncadd %s530, %s538
          %s540 = smul.addr %s31, 2
          %s541 = sadd.s32 %s32, %s540
          %s542 = smul.addr %s541, 128
          %s543 = scalar_lea.hbm %s5, %s542
          %s545 = sshll.u32 %s533, 4
          %s546 = int_to_ptr.vmem [resolvable:$true] %s545
          %548 = dma.vmem_to_hbm [thread:$0]  %s546, 128, %s543, %s530
        $region68: #{tpu_custom_call.1} parent=39 // pred_fallthru
          _
      $region40: #{tpu_custom_call.1} parent=5 // pred_fallthru
        _
      %p549 = scmp.le.s32.totalorder 2, %s21
      // Predicated region
      $region69: #{tpu_custom_call.1} parent=5 // pred_check
        %p550 = pneg %p549
      $region70: #{tpu_custom_call.1} parent=5 // pred_check_branch
        %552 = sbr.rel (%p550) target = $region72
      $region71: #{tpu_custom_call.1} parent=5 // pred_region
        %s553 = ssub.s32 %s21, 2
        // Predicated region
        $region73: #{tpu_custom_call.1} parent=71 // pred_check
          %p554 = pneg %p202
        $region74: #{tpu_custom_call.1} parent=71 // pred_check_branch
          %556 = sbr.rel (%p554) target = $region76
        $region75: #{tpu_custom_call.1} parent=71 // pred_region
          %s557 = sand.u32 %s187, 1
          %s558 = scalar_lea.sflag [#allocation5], %s557
          %s559 = sand.u32 %s187, 1
          %s560 = smul.addr %s559, 8
          %s561 = scalar_lea.vmem [#allocation11], %s560
          %562 = dma.done %s558, 128
        $region76: #{tpu_custom_call.1} parent=71 // pred_fallthru
          _
      $region72: #{tpu_custom_call.1} parent=5 // pred_fallthru
        _
    $region6: #{tpu_custom_call.1} parent=1 // loop_footer
      %s25 = sadd.s32 1, %s21
    $region7: #{tpu_custom_call.1} parent=1 // loop_footer_branch
      %20 = sbr.rel target = $region3
    $region8: #{tpu_custom_call.1} parent=1 // loop_exit
      _
    %563 = vsyncpa [#allocation4], 1
    %s564 = scalar_lea.sflag [#allocation4], 1
    %565 = vsyncpa %s564, 1
    %566 = vsyncpa [#allocation9], 1
    %s567 = scalar_lea.sflag [#allocation9], 1
    %568 = vsyncpa %s567, 1
    %569 = vsyncpa [#allocation5], 1
    %s570 = scalar_lea.sflag [#allocation5], 1
    %571 = vsyncpa %s570, 1
    %572 = vsyncpa [#allocation6], 1
    %s573 = scalar_lea.sflag [#allocation6], 1
    %574 = vsyncpa %s573, 1

</llo_original>
